<compile_context>
chip_gen: v5e
topology: v5e:2x2
jax: 0.10.0
libtpu: 0.0.40
codegen_flags: <defaults>
</compile_context>

<pallas_src>
import functools

import jax
import jax.numpy as jnp
import numpy as np
from jax import lax
from jax.experimental import pallas as pl
from jax.experimental.pallas import tpu as pltpu


_NEG_INF = -1e30  # large finite negative (causal diagonal guarantees no all-masked row)


def _pick_tile(dim, preferred, align):
    """Largest multiple of `align` dividing `dim`, <= preferred; else full dim."""
    t = min(preferred, dim)
    t = (t // align) * align
    while t >= align:
        if dim % t == 0:
            return t
        t -= align
    return dim


# ----------------------------- tiled linear kernel ------------------------------

def _linear_kernel(x_ref, w_ref, b_ref, o_ref, acc_ref):
    @pl.when(pl.program_id(2) == 0)
    def _():
        acc_ref[...] = jnp.zeros_like(acc_ref)

    acc_ref[...] += jnp.dot(x_ref[...], w_ref[...],
                            preferred_element_type=jnp.float32)

    @pl.when(pl.program_id(2) == pl.num_programs(2) - 1)
    def _():
        o_ref[...] = (acc_ref[...] + b_ref[...]).astype(o_ref.dtype)


def linear(x2d, w, b, *, out_dtype=jnp.float32, tm=512, tn=512, tk=1024):
    """y = x2d @ w + b with a tiled, pipelined Pallas matmul (f32 accumulation)."""
    M, K = x2d.shape
    Nout = w.shape[1]
    in_it = jnp.dtype(x2d.dtype).itemsize
    out_it = jnp.dtype(out_dtype).itemsize
    tm = _pick_tile(M, tm, 16)      # 16: bf16 sublane-packed tile alignment
    tn = _pick_tile(Nout, tn, 128)
    tk = _pick_tile(K, tk, 128)
    grid = (M // tm, Nout // tn, K // tk)

    bytes_acc = int((M * K + K * Nout) * in_it + M * Nout * out_it)
    # double-buffered inputs/output + f32 accumulator + bias, plus headroom
    vmem_est = (2 * (tm * tk + tk * tn) * in_it
                + 2 * tm * tn * out_it + tm * tn * 4 + 2 * tn * 4)
    vmem_limit = int(min(max(2 * vmem_est, 32 << 20), 64 << 20))

    return pl.pallas_call(
        _linear_kernel,
        out_shape=jax.ShapeDtypeStruct((M, Nout), out_dtype),
        grid=grid,
        in_specs=[
            pl.BlockSpec((tm, tk), lambda i, j, k: (i, k)),
            pl.BlockSpec((tk, tn), lambda i, j, k: (k, j)),
            pl.BlockSpec((1, tn), lambda i, j, k: (0, j)),
        ],
        out_specs=pl.BlockSpec((tm, tn), lambda i, j, k: (i, j)),
        scratch_shapes=[pltpu.VMEM((tm, tn), jnp.float32)],
        compiler_params=pltpu.CompilerParams(
            dimension_semantics=("parallel", "parallel", "arbitrary"),
            vmem_limit_bytes=vmem_limit),
        cost_estimate=pl.CostEstimate(flops=2 * M * K * Nout,
                                      transcendentals=0,
                                      bytes_accessed=bytes_acc),
    )(x2d, w, b.reshape(1, Nout).astype(jnp.float32))


# ----------------------------- fused attention kernel ------------------------------

def _attn_kernel(q_ref, kv_ref, pref_ref, o_ref, *, num_heads, head_dim, use_mask):
    # q_ref: (tq, C) compute dtype (scale already folded into the Q projection)
    # kv_ref: (N, 2C) compute dtype; pref_ref: (1, N) int32; o_ref: (tq, C)
    C = num_heads * head_dim
    q_all = q_ref[...]
    kv = kv_ref[...]
    tq = q_all.shape[0]
    N = kv.shape[0]

    if use_mask:
        # prefix-causal mask built in-kernel: allowed[i, j] = (j <= i_abs) or prefix[j]
        q_start = pl.program_id(1) * tq
        q_ids = q_start + lax.broadcasted_iota(jnp.int32, (tq, N), 0)
        k_ids = lax.broadcasted_iota(jnp.int32, (tq, N), 1)
        allowed = (k_ids <= q_ids) | (pref_ref[...] > 0)        # (tq,N) | (1,N)

    # TODO(synk): switch to lax.fori_loop over heads (pl.ds slices) when head_dim
    # is a multiple of 128; unrolled loop is fine for small Dh.
    for h in range(num_heads):
        q = q_all[:, h * head_dim:(h + 1) * head_dim]           # (tq, Dh)
        k = kv[:, h * head_dim:(h + 1) * head_dim]              # (N, Dh)
        v = kv[:, C + h * head_dim:C + (h + 1) * head_dim]      # (N, Dh)

        # MXU contraction over head_dim without materializing k.T.
        s = lax.dot_general(q, k, dimension_numbers=(((1,), (1,)), ((), ())),
                            preferred_element_type=jnp.float32)  # (tq, N) f32
        if use_mask:
            s = jnp.where(allowed, s, _NEG_INF)

        # Stable softmax with deferred normalization: normalize the (tq, Dh)
        # output rather than the (tq, N) probability matrix.
        s = s - jnp.max(s, axis=-1, keepdims=True)
        p = jnp.exp(s)
        l = jnp.sum(p, axis=-1, keepdims=True)                   # (tq, 1) f32

        o = jnp.dot(p.astype(kv.dtype), v,
                    preferred_element_type=jnp.float32)          # (tq, Dh) f32
        o = o * pl.reciprocal(l, approx=True)

        # Direct channel-slice store (matches PyTorch transpose(1,2).reshape layout).
        o_ref[:, h * head_dim:(h + 1) * head_dim] = o.astype(o_ref.dtype)


def attention_core(q, kv, pref, *, num_heads, head_dim, use_mask, out_dtype,
                   tq_preferred=256):
    """Scaled-dot-product attention: grid over (batch, query tiles)."""
    B, N, C = q.shape
    cdt_it = jnp.dtype(q.dtype).itemsize
    out_it = jnp.dtype(out_dtype).itemsize
    tq = _pick_tile(N, tq_preferred, 16)
    grid = (B, N // tq)

    kern = functools.partial(_attn_kernel, num_heads=num_heads,
                             head_dim=head_dim, use_mask=use_mask)

    flops = int(4 * B * num_heads * N * N * head_dim)
    bytes_acc = int((q.size + kv.size) * cdt_it + pref.size * 4
                    + B * N * C * out_it)
    # double-buffered q/kv/pref/out blocks + in-kernel (tq, N) f32 score temporaries
    vmem_est = (2 * (tq * C + N * 2 * C) * cdt_it + 2 * N * 4
                + 2 * tq * C * out_it + 3 * tq * N * 4)
    vmem_limit = int(min(max(2 * vmem_est, 32 << 20), 64 << 20))

    return pl.pallas_call(
        kern,
        out_shape=jax.ShapeDtypeStruct((B, N, C), out_dtype),
        grid=grid,
        in_specs=[
            pl.BlockSpec((None, tq, C), lambda b, qi: (b, qi, 0)),     # Q follows q-tiles
            pl.BlockSpec((None, N, 2 * C), lambda b, qi: (b, 0, 0)),   # KV per batch
            pl.BlockSpec((None, 1, N), lambda b, qi: (b, 0, 0)),       # prefix vector
        ],
        out_specs=pl.BlockSpec((None, tq, C), lambda b, qi: (b, qi, 0)),
        compiler_params=pltpu.CompilerParams(
            dimension_semantics=("parallel", "parallel"),
            vmem_limit_bytes=vmem_limit),
        cost_estimate=pl.CostEstimate(flops=flops,
                                      transcendentals=int(B * num_heads * N * N),
                                      bytes_accessed=bytes_acc),
    )(q, kv, pref)


# ------------------------------ module wrapper ------------------------------

def init_params(key, dim, qkv_bias=False):
    """Deterministic synthetic parameters (nn.Linear weights, pre-transposed)."""
    k1, k2, k3, k4 = jax.random.split(key, 4)
    s = 1.0 / np.sqrt(dim)
    w_qkv = jax.random.uniform(k1, (dim, 3 * dim), jnp.float32, -s, s)
    b_qkv = (jax.random.uniform(k2, (3 * dim,), jnp.float32, -s, s)
             if qkv_bias else jnp.zeros((3 * dim,), jnp.float32))
    w_proj = jax.random.uniform(k3, (dim, dim), jnp.float32, -s, s)
    b_proj = jax.random.uniform(k4, (dim,), jnp.float32, -s, s)
    return {"w_qkv": w_qkv, "b_qkv": b_qkv, "w_proj": w_proj, "b_proj": b_proj}


def attention_forward(x, params, num_heads, prefix_causal_mask=False,
                      prefix_mask=None, compute_dtype=jnp.bfloat16):
    B, N, C = x.shape
    H = num_heads
    Dh = C // H
    scale = Dh ** (-0.5)
    cdt = compute_dtype

    # ---- fold the softmax scale into the Q projection (constant transform) ----
    w_q = (params["w_qkv"][:, :C] * scale).astype(cdt)
    b_q = params["b_qkv"][:C] * scale
    w_kv = params["w_qkv"][:, C:].astype(cdt)
    b_kv = params["b_qkv"][C:]

    # ---- Q / KV projections (tiled Pallas matmuls, bf16 MXU inputs, f32 accum) ----
    x2d = x.reshape(B * N, C).astype(cdt)
    q = linear(x2d, w_q, b_q, out_dtype=cdt).reshape(B, N, C)
    kv = linear(x2d, w_kv, b_kv, out_dtype=cdt).reshape(B, N, 2 * C)

    # ---- tiny (B,1,N) int32 prefix vector; mask is built inside the kernel ----
    if prefix_causal_mask:
        assert prefix_mask is not None, "A mask is required for PrefixLM Causal Attention."
        pref = prefix_mask.astype(jnp.int32).reshape(B, 1, N)
    else:
        pref = jnp.zeros((B, 1, N), jnp.int32)               # ignored by kernel

    # ---- fused multi-head attention (grid over batch x query tiles) ----
    o = attention_core(q, kv, pref, num_heads=H, head_dim=Dh,
                       use_mask=prefix_causal_mask, out_dtype=cdt)    # (B, N, C)

    # ---- output projection (tiled Pallas matmul); f32 output to match module ----
    out = linear(o.reshape(B * N, C), params["w_proj"].astype(cdt),
                 params["b_proj"], out_dtype=jnp.float32)
    # dropout p=0.0 -> identity
    return out.reshape(B, N, C)


# ------------------------------ pure-JAX reference ------------------------------

def attention_reference(x, params, num_heads, prefix_causal_mask=False, prefix_mask=None):
    B, N, C = x.shape
    H = num_heads
    Dh = C // H
    scale = Dh ** (-0.5)
    qkv = x.reshape(B * N, C) @ params["w_qkv"] + params["b_qkv"]
    qkv = qkv.reshape(B, N, 3, H, Dh).transpose(2, 0, 3, 1, 4)
    q, k, v = qkv[0], qkv[1], qkv[2]
    s = jnp.einsum("bhqd,bhkd->bhqk", q, k) * scale
    if prefix_causal_mask:
        causal = jnp.tril(jnp.ones((N, N), dtype=bool))
        pm = jnp.broadcast_to(prefix_mask[:, None, :].astype(bool), (B, N, N))
        mask = jnp.logical_or(causal[None], pm)[:, None, :, :]
        s = jnp.where(mask, s, -jnp.inf)
    p = jax.nn.softmax(s, axis=-1)
    o = jnp.einsum("bhqk,bhkd->bhqd", p, v)
    o = o.transpose(0, 2, 1, 3).reshape(B * N, C)
    return (o @ params["w_proj"] + params["b_proj"]).reshape(B, N, C)


# ------------------------------------ main ------------------------------------

if __name__ == "__main__":
    B, N, C, H = 2, 8, 32, 8          # head_dim = 4
    key = jax.random.PRNGKey(0)
    kx, kp = jax.random.split(key, 2)

    x = jax.random.normal(kx, (B, N, C), jnp.float32)
    params = init_params(kp, C, qkv_bias=False)

    # prefix lengths 3 and 5 for the two batch elements
    prefix_len = jnp.array([3, 5])
    prefix_mask = (jnp.arange(N)[None, :] < prefix_len[:, None])  # (B, N) bool

    # prefix-causal-masked path
    out_m = attention_forward(x, params, num_heads=H,
                              prefix_causal_mask=True, prefix_mask=prefix_mask)
    out_m = jax.block_until_ready(out_m)
    ref_m = attention_reference(x, params, num_heads=H,
                                prefix_causal_mask=True, prefix_mask=prefix_mask)
    # bf16 MXU inputs, f32 accumulation, approx reciprocal -> loose tolerance
    np.testing.assert_allclose(np.asarray(out_m), np.asarray(ref_m),
                               rtol=5e-2, atol=5e-2)

    # unmasked path
    out_p = attention_forward(x, params, num_heads=H, prefix_causal_mask=False)
    out_p = jax.block_until_ready(out_p)
    ref_p = attention_reference(x, params, num_heads=H, prefix_causal_mask=False)
    np.testing.assert_allclose(np.asarray(out_p), np.asarray(ref_p),
                               rtol=5e-2, atol=5e-2)

    print("KERNEL_OK")
</pallas_src>

<mosaic_0001>
module attributes {stable_mosaic.version = 11 : i64} {
  func.func @_linear_kernel(%arg0: i32, %arg1: i32, %arg2: i32, %arg3: memref<16x32xbf16, #tpu.memory_space<vmem>>, %arg4: memref<32x32xbf16, #tpu.memory_space<vmem>>, %arg5: memref<1x32xf32, #tpu.memory_space<vmem>>, %arg6: memref<16x32xbf16, #tpu.memory_space<vmem>>, %arg7: memref<16x32xf32, #tpu.memory_space<vmem>>) attributes {dimension_semantics = [#tpu.dimension_semantics<parallel>, #tpu.dimension_semantics<parallel>, #tpu.dimension_semantics<arbitrary>], iteration_bounds = array<i64: 1, 1, 1>, scalar_prefetch = 0 : i64, scratch_operands = 1 : i64, tpu.core_type = #tpu.core_type<tc>, window_params = [{transform_indices = @transform_0, window_bounds = array<i64: 16, 32>}, {transform_indices = @transform_1, window_bounds = array<i64: 32, 32>}, {transform_indices = @transform_2, window_bounds = array<i64: 1, 32>}, {transform_indices = @transform_3, window_bounds = array<i64: 16, 32>}]} {
    %c0_i32 = arith.constant 0 : i32
    %0 = arith.cmpi eq, %arg2, %c0_i32 : i32
    %1 = arith.extui %0 : i1 to i32
    %c0_i32_0 = arith.constant 0 : i32
    %2 = arith.cmpi ne, %1, %c0_i32_0 : i32
    scf.if %2 {
      %cst_10 = arith.constant 0.000000e+00 : f32
      %12 = vector.broadcast %cst_10 : f32 to vector<16x32xf32>
      %c0_11 = arith.constant 0 : index
      %c0_12 = arith.constant 0 : index
      %13 = vector.load %arg7[%c0_11, %c0_12] : memref<16x32xf32, #tpu.memory_space<vmem>>, vector<16x32xf32>
      tpu.vector_store %arg7[%c0_11, %c0_12], %12 {strides = array<i32>} : memref<16x32xf32, #tpu.memory_space<vmem>>, vector<16x32xf32>,
    } else {
    }
    %c0 = arith.constant 0 : index
    %c0_1 = arith.constant 0 : index
    %3 = vector.load %arg7[%c0, %c0_1] : memref<16x32xf32, #tpu.memory_space<vmem>>, vector<16x32xf32>
    %c0_2 = arith.constant 0 : index
    %c0_3 = arith.constant 0 : index
    %4 = vector.load %arg3[%c0_2, %c0_3] : memref<16x32xbf16, #tpu.memory_space<vmem>>, vector<16x32xbf16>
    %c0_4 = arith.constant 0 : index
    %c0_5 = arith.constant 0 : index
    %5 = vector.load %arg4[%c0_4, %c0_5] : memref<32x32xbf16, #tpu.memory_space<vmem>>, vector<32x32xbf16>
    %cst = arith.constant dense<0.000000e+00> : vector<16x32xf32>
    %6 = tpu.matmul %4, %5, %cst {dimension_numbers = #tpu.dot_dimension_numbers<[1], [0], [0], [1], [0, 0, 1, 1], [], []>} : vector<16x32xbf16>, vector<32x32xbf16>, vector<16x32xf32> -> vector<16x32xf32>
    %7 = arith.addf %3, %6 : vector<16x32xf32>
    %c0_6 = arith.constant 0 : index
    %c0_7 = arith.constant 0 : index
    %8 = vector.load %arg7[%c0_6, %c0_7] : memref<16x32xf32, #tpu.memory_space<vmem>>, vector<16x32xf32>
    tpu.vector_store %arg7[%c0_6, %c0_7], %7 {strides = array<i32>} : memref<16x32xf32, #tpu.memory_space<vmem>>, vector<16x32xf32>,
    %c0_i32_8 = arith.constant 0 : i32
    %9 = arith.cmpi eq, %arg2, %c0_i32_8 : i32
    %10 = arith.extui %9 : i1 to i32
    %c0_i32_9 = arith.constant 0 : i32
    %11 = arith.cmpi ne, %10, %c0_i32_9 : i32
    scf.if %11 {
      %c0_10 = arith.constant 0 : index
      %c0_11 = arith.constant 0 : index
      %12 = vector.load %arg7[%c0_10, %c0_11] : memref<16x32xf32, #tpu.memory_space<vmem>>, vector<16x32xf32>
      %c0_12 = arith.constant 0 : index
      %c0_13 = arith.constant 0 : index
      %13 = vector.load %arg5[%c0_12, %c0_13] : memref<1x32xf32, #tpu.memory_space<vmem>>, vector<1x32xf32>
      %14 = vector.broadcast %13 : vector<1x32xf32> to vector<16x32xf32>
      %15 = arith.addf %12, %14 : vector<16x32xf32>
      %16 = arith.truncf %15 : vector<16x32xf32> to vector<16x32xbf16>
      %c0_14 = arith.constant 0 : index
      %c0_15 = arith.constant 0 : index
      %17 = vector.load %arg6[%c0_14, %c0_15] : memref<16x32xbf16, #tpu.memory_space<vmem>>, vector<16x32xbf16>
      tpu.vector_store %arg6[%c0_14, %c0_15], %16 {strides = array<i32>} : memref<16x32xbf16, #tpu.memory_space<vmem>>, vector<16x32xbf16>,
    } else {
    }
    return
  }
  func.func @transform_0(%arg0: i32, %arg1: i32, %arg2: i32) -> (i32, i32) {
    %c0_i32 = arith.constant 0 : i32
    return %arg0, %arg2 : i32, i32
  }
  func.func @transform_1(%arg0: i32, %arg1: i32, %arg2: i32) -> (i32, i32) {
    %c0_i32 = arith.constant 0 : i32
    return %arg2, %arg1 : i32, i32
  }
  func.func @transform_2(%arg0: i32, %arg1: i32, %arg2: i32) -> (i32, i32) {
    %c0_i32 = arith.constant 0 : i32
    %c0_i32_0 = arith.constant 0 : i32
    return %c0_i32, %arg1 : i32, i32
  }
  func.func @transform_3(%arg0: i32, %arg1: i32, %arg2: i32) -> (i32, i32) {
    %c0_i32 = arith.constant 0 : i32
    return %arg0, %arg1 : i32, i32
  }
}

</mosaic_0001>

<llo_original>
// kernel: tpu_custom_call.1
$region0: #{tpu_custom_call.1}
  #allocation0 [shape = 'u32[]', space=smem, size = 0x4, offset = 0x4, fixed_abs, tag = 'smem constant byte address 0x4 - core index']
  #allocation1 [shape = 'u32[72,128]{1,0:T(1,128)}', space=vmem, size = 0x9000, scoped, tag = 'internal scratch']
  #allocation2 [shape = 'f32[16,32]{1,0:T(8,128)}', space=vmem, size = 0x2000, scoped, tag = 'scratch operand']
  %s0 = inlined_call_operand.hbm [shape: bf16[16,32], index: 0, kind: input, shape index: {}]
  %s1 = inlined_call_operand.hbm [shape: bf16[32,32], index: 1, kind: input, shape index: {}]
  %s2 = inlined_call_operand.vmem [shape: f32[1,32], index: 2, kind: input, shape index: {}]
  %s3 = inlined_call_operand.hbm [shape: bf16[16,32], index: 3, kind: output, shape index: {}]
  %s4 = sld [smem:[#allocation0]]
  $region38: #{tpu_custom_call.1} parent=0
    _
  %s6 = ssub.s32 1, %s4
  %s7 = scalar_select 0, %s6, %s4
  $region1: #{tpu_custom_call.1} parent=0
    #allocation3 [shape = 'u8[4096]{0}', space=vmem, size = 0x1000, scoped, tag = 'input window, operand 0, single buffered']
    #allocation4 [shape = 's32[1]{0}', space=sflag, size = 0x4, scoped, tag = 'scoped memory for tpu_custom_call.1']
    #allocation5 [shape = 's32[1]{0}', space=sflag, size = 0x4, scoped, tag = 'scoped memory for tpu_custom_call.1']
    #allocation6 [shape = 'u8[8192]{0}', space=vmem, size = 0x2000, scoped, tag = 'input window, operand 1, single buffered']
    #allocation7 [shape = 's32[1]{0}', space=sflag, size = 0x4, scoped, tag = 'scoped memory for tpu_custom_call.1']
    #allocation8 [shape = 'u8[4096]{0}', space=vmem, size = 0x1000, scoped, tag = 'output window, operand 0, single buffered']
    %8 = vsyncpa [#allocation4], 0
    %9 = vsyncpa [#allocation7], 0
    %10 = vsyncpa [#allocation5], 0
    // Predicated region
    $region2: #{tpu_custom_call.1} parent=1 // pred_check
      _
    $region3: #{tpu_custom_call.1} parent=1 // pred_check_branch
      %12 = sbr.rel (0) target = $region5
    $region4: #{tpu_custom_call.1} parent=1 // pred_region
      %14 = vsyncadd [#allocation4], 0
      %s15 = sshll.u32 %s0, 4
      %s16 = int_to_ptr.hbm [resolvable:$true] %s15
      %s17 = sshll.u32 [#allocation3], 4
      %s18 = int_to_ptr.vmem [resolvable:$true] %s17
      %23 = dma.hbm_to_vmem [thread:$0]  %s16, 128, %s18, [#allocation4], 64, 64, 4
    $region5: #{tpu_custom_call.1} parent=1 // pred_fallthru
      _
    // Predicated region
    $region6: #{tpu_custom_call.1} parent=1 // pred_check
      _
    $region7: #{tpu_custom_call.1} parent=1 // pred_check_branch
      %25 = sbr.rel (0) target = $region9
    $region8: #{tpu_custom_call.1} parent=1 // pred_region
      %27 = vsyncadd [#allocation7], 0
      %s28 = sshll.u32 %s1, 4
      %s29 = int_to_ptr.hbm [resolvable:$true] %s28
      %s30 = sshll.u32 [#allocation6], 4
      %s31 = int_to_ptr.vmem [resolvable:$true] %s30
      %36 = dma.hbm_to_vmem [thread:$0]  %s29, 256, %s31, [#allocation7], 64, 64, 4
    $region9: #{tpu_custom_call.1} parent=1 // pred_fallthru
      _
    // Predicated region
    $region10: #{tpu_custom_call.1} parent=1 // pred_check
      _
    $region11: #{tpu_custom_call.1} parent=1 // pred_check_branch
      %38 = sbr.rel (0) target = $region13
    $region12: #{tpu_custom_call.1} parent=1 // pred_region
      _
    $region13: #{tpu_custom_call.1} parent=1 // pred_fallthru
      _
    // Predicated region
    $region14: #{tpu_custom_call.1} parent=1 // pred_check
      _
    $region15: #{tpu_custom_call.1} parent=1 // pred_check_branch
      %40 = sbr.rel (0) target = $region17
    $region16: #{tpu_custom_call.1} parent=1 // pred_region
      %42 = dma.done [#allocation4], 128
    $region17: #{tpu_custom_call.1} parent=1 // pred_fallthru
      _
    // Predicated region
    $region18: #{tpu_custom_call.1} parent=1 // pred_check
      _
    $region19: #{tpu_custom_call.1} parent=1 // pred_check_branch
      %44 = sbr.rel (0) target = $region21
    $region20: #{tpu_custom_call.1} parent=1 // pred_region
      %46 = dma.done [#allocation7], 256
    $region21: #{tpu_custom_call.1} parent=1 // pred_fallthru
      _
    %p48 = scmp.eq.s32.totalorder 0, 0
    // Predicated region
    $region22: #{tpu_custom_call.1} parent=1 // pred_check
      %p49 = pneg %p48
    $region23: #{tpu_custom_call.1} parent=1 // pred_check_branch
      %51 = sbr.rel (%p49) target = $region25
    $region24: #{tpu_custom_call.1} parent=1 // pred_region
      %vm52 = vcmask 261120
      %53 = vst.msk [vmem:[#allocation2] sm:$0xff] %vm52, 0.0
      %54 = vst.msk [vmem:[#allocation2 + $0x8] sm:$0xff] %vm52, 0.0
    $region25: #{tpu_custom_call.1} parent=1 // pred_fallthru
      _
    %v55 = vld [vmem:[#allocation2] sm:$0xff]
    %v56 = vld [vmem:[#allocation2 + $0x8] sm:$0xff]
    %v57 = vld [vmem:[#allocation3] sm:$0xf]
    %v58 = vld [vmem:[#allocation3 + $0x4] sm:$0xf]
    %v59 = vld [vmem:[#allocation6] sm:$0xf]
    %v60 = vld [vmem:[#allocation6 + $0x4] sm:$0xf]
    %v61 = vld [vmem:[#allocation6 + $0x8] sm:$0xf]
    %v62 = vld [vmem:[#allocation6 + $0xc] sm:$0xf]
    %v65 = vunpack.c.l.b16 %v57
    %v66 = vunpack.c.l.b16 %v58
    %v67 = vpack.c.b16 %v66, %v65
    %v72 = vunpack.c.l.b16 %v59
    %v73 = vunpack.c.l.b16 %v60
    %v74 = vunpack.c.l.b16 %v61
    %v75 = vunpack.c.l.b16 %v62
    %v76 = vpack.c.b16 %v73, %v72
    %v77 = vpack.c.b16 %v75, %v74
    %vm80 = vcmask 261120
    %v82 = vsel %vm80, %v67, 0
    %84 = vmatpush.bf16.msra.mxu0 0
    %85 = vmatpush.bf16.msra.mxu0 0
    %86 = vmatpush.bf16.msra.mxu0 0
    %87 = vmatpush.bf16.msra.mxu0 0
    %88 = vmatpush.bf16.msra.mxu0 0
    %89 = vmatpush.bf16.msra.mxu0 0
    %90 = vmatpush.bf16.msra.mxu0 %v77
    %91 = vmatpush.bf16.msra.mxu0 %v76
    %92 = vmatmul.bf16.gmra.mxu0 %v82
    %v93 = vpop.f32.mrf.mxu0
    %v94 = vadd.f32 0.0, %v93
    %v95 = vpop.f32.mrf.mxu0
    %v96 = vadd.f32 0.0, %v95
    %97 = vdwg.mxu0
    %v98 = vadd.f32 %v55, %v94
    %v99 = vadd.f32 %v56, %v96
    %100 = vst.msk [vmem:[#allocation2] sm:$0xff] %vm80, %v98
    %101 = vst.msk [vmem:[#allocation2 + $0x8] sm:$0xff] %vm80, %v99
    // Predicated region
    $region26: #{tpu_custom_call.1} parent=1 // pred_check
      %p102 = pneg %p48
    $region27: #{tpu_custom_call.1} parent=1 // pred_check_branch
      %104 = sbr.rel (%p102) target = $region29
    $region28: #{tpu_custom_call.1} parent=1 // pred_region
      %v105 = vld [vmem:[#allocation2] sm:$0xff]
      %v106 = vld [vmem:[#allocation2 + $0x8] sm:$0xff]
      %v107 = vld [vmem:[%s2] sm:$0x1]
      %v109 = vperm.slane %v107, 0
      %v111 = vadd.f32 %v105, %v109
      %v112 = vadd.f32 %v106, %v109
      %v113 = vpack.c.bf16 %v111, %v111
      %v114 = vpack.c.bf16 %v112, %v112
      %vm115 = vcmask 257024
      %116 = vst.msk [vmem:[#allocation8] sm:$0xf] %vm115, %v113
      %117 = vst.msk [vmem:[#allocation8 + $0x4] sm:$0xf] %vm115, %v114
    $region29: #{tpu_custom_call.1} parent=1 // pred_fallthru
      _
    // Predicated region
    $region30: #{tpu_custom_call.1} parent=1 // pred_check
      _
    $region31: #{tpu_custom_call.1} parent=1 // pred_check_branch
      %119 = sbr.rel (0) target = $region33
    $region32: #{tpu_custom_call.1} parent=1 // pred_region
      %121 = vsyncadd [#allocation5], 0
      %s122 = sshll.u32 [#allocation8], 4
      %s123 = int_to_ptr.vmem [resolvable:$true] %s122
      %s124 = sshll.u32 %s3, 4
      %s125 = int_to_ptr.hbm [resolvable:$true] %s124
      %130 = dma.vmem_to_hbm [thread:$0]  %s123, 128, %s125, [#allocation5], 64, 64, 4
    $region33: #{tpu_custom_call.1} parent=1 // pred_fallthru
      _
    // Predicated region
    $region34: #{tpu_custom_call.1} parent=1 // pred_check
      _
    $region35: #{tpu_custom_call.1} parent=1 // pred_check_branch
      %132 = sbr.rel (0) target = $region37
    $region36: #{tpu_custom_call.1} parent=1 // pred_region
      %134 = dma.done [#allocation5], 128
    $region37: #{tpu_custom_call.1} parent=1 // pred_fallthru
      _
    %135 = vsyncpa [#allocation4], 1
    %136 = vsyncpa [#allocation7], 1
    %137 = vsyncpa [#allocation5], 1

</llo_original>
